<compile_context>
chip_gen: v7x
topology: tpu7x:2x2x1
jax: 0.10.0
libtpu: 0.0.40
codegen_flags: <defaults>
</compile_context>

<pallas_src>
import functools

import jax
import jax.numpy as jnp
from jax.experimental import pallas as pl
from jax.experimental.pallas import tpu as pltpu

LANE = 128


def _round_up(x, m):
    return ((x + m - 1) // m) * m


def mlp_kernel(x_ref, w1_ref, b1_ref, w2_ref, b2_ref, o_ref):
    # In-kernel cast of the activation tile to the weight dtype (bf16);
    # fc1 on the MXU with f32 accumulation.
    x = x_ref[...].astype(w1_ref.dtype)
    h = jnp.dot(x, w1_ref[...], preferred_element_type=jnp.float32)
    # Bias add + ReLU ride the VPU in f32; b1 is (1, H_p) and broadcasts.
    h = jnp.maximum(h + b1_ref[...], 0.0)
    # fc2: downcast activation to bf16, f32 accumulation, add bias, then store
    # a lane-dense tile directly in the caller's dtype.
    y = jnp.dot(h.astype(w2_ref.dtype), w2_ref[...],
                preferred_element_type=jnp.float32)
    o_ref[...] = (y + b2_ref[...]).astype(o_ref.dtype)


def _const_spec(shape):
    """BlockSpec for a grid-invariant operand: constant index_map + single
    pipeline buffer (no useless double-buffer / revisit bookkeeping)."""
    index_map = lambda i: (0,) * len(shape)
    try:
        return pl.BlockSpec(shape, index_map, pipeline_mode=pl.Buffered(1))
    except (TypeError, ValueError):
        # Fallback for jax versions without per-spec buffer counts.
        return pl.BlockSpec(shape, index_map)


@functools.partial(jax.jit,
                   static_argnames=("hidden", "classes", "block_batch"))
def _forward_padded(x, w1p, b1p, w2p, b2p, *, hidden, classes,
                    block_batch=None):
    """Fused ReLU(x @ W1p + b1p) @ W2p + b2p on pre-padded parameters."""
    B, dim = x.shape
    hid_p = w1p.shape[1]
    cls_p = w2p.shape[1]
    out_dtype = x.dtype
    x_esz = jnp.dtype(x.dtype).itemsize
    w_esz = jnp.dtype(w1p.dtype).itemsize
    o_esz = jnp.dtype(out_dtype).itemsize

    # ---- batch tile: f32 sublane alignment (8); <=256 rows keeps the f32
    # intermediate (block_batch x hid_p) inside the vreg file; large batches
    # get >=2 grid steps so both v7x TensorCores are used. -------------------
    if block_batch is None:
        if B <= 256:
            block_batch = _round_up(B, 8)
        else:
            block_batch = min(256, _round_up((B + 1) // 2, 8))
    if block_batch % 8 != 0:
        raise ValueError(f"block_batch must be a multiple of 8, got {block_batch}")

    B_p = _round_up(B, block_batch)
    xp = x if B_p == B else jnp.pad(x, ((0, B_p - B), (0, 0)))  # rows only
    grid = (B_p // block_batch,)

    # ---- VMEM budget: double-buffered x/out tiles, single-buffered weights,
    # f32 intermediate + slack; capped at the 32 MiB scoped default. ---------
    vmem_bytes = (2 * block_batch * dim * x_esz      # x tiles (double-buffered)
                  + dim * hid_p * w_esz              # W1 (single-buffered)
                  + hid_p * cls_p * w_esz            # W2 (single-buffered)
                  + (hid_p + cls_p) * 4              # biases (f32)
                  + 2 * block_batch * cls_p * o_esz  # output tiles
                  + 2 * block_batch * hid_p * 4)     # f32 intermediate + slack
    vmem_limit = int(min(max(vmem_bytes + (1 << 20), 4 << 20), 32 << 20))

    # True (unpadded) dims for the scheduler hint.
    cost = pl.CostEstimate(
        flops=2 * B * dim * hidden + 2 * B * hidden * classes,
        transcendentals=0,
        bytes_accessed=(B * dim * x_esz
                        + dim * hidden * w_esz + hidden * classes * w_esz
                        + (hidden + classes) * 4
                        + B * classes * o_esz),
    )

    out_p = pl.pallas_call(
        mlp_kernel,
        out_shape=jax.ShapeDtypeStruct((B_p, cls_p), out_dtype),
        grid_spec=pl.GridSpec(
            grid=grid,
            in_specs=[
                # x: unpadded feature dim (== full array dim) -> no pad/cast
                # pass in the wrapper; cast to bf16 happens in-kernel.
                pl.BlockSpec((block_batch, dim), lambda i: (i, 0)),
                _const_spec((dim, hid_p)),   # W1 (resident, single buffer)
                _const_spec((1, hid_p)),     # b1
                _const_spec((hid_p, cls_p)), # W2
                _const_spec((1, cls_p)),     # b2
            ],
            out_specs=pl.BlockSpec((block_batch, cls_p), lambda i: (i, 0)),
        ),
        compiler_params=pltpu.CompilerParams(
            dimension_semantics=("parallel",),
            vmem_limit_bytes=vmem_limit),
        cost_estimate=cost,
    )(xp, w1p, b1p, w2p, b2p)

    # Slice away batch/class padding; dtype already matches the caller's.
    return out_p[:B, :classes]


class PallasNet:
    """Pallas-backed Net(dim, classes, hidden): fc2(ReLU(fc1(x))).

    Weights use the (in, out) layout (transpose of torch.nn.Linear.weight).
    Parameter padding/casting is done ONCE here and reused across calls.
    """

    def __init__(self, w1, b1, w2, b2, compute_dtype=jnp.bfloat16):
        dim, hidden = w1.shape
        hidden2, classes = w2.shape
        assert hidden2 == hidden and b1.shape == (hidden,) and b2.shape == (classes,)
        self.dim, self.hidden, self.classes = dim, hidden, classes

        hid_p = _round_up(hidden, LANE)
        cls_p = _round_up(classes, LANE)
        # Zero padding keeps padded hidden lanes exactly 0 after ReLU and the
        # padded class lanes are sliced off, so padding cannot leak into results.
        self.w1p = jnp.zeros((dim, hid_p), compute_dtype).at[:, :hidden].set(
            w1.astype(compute_dtype))
        self.b1p = jnp.zeros((1, hid_p), jnp.float32).at[:, :hidden].set(
            b1.reshape(1, hidden).astype(jnp.float32))
        self.w2p = jnp.zeros((hid_p, cls_p), compute_dtype).at[:hidden, :classes].set(
            w2.astype(compute_dtype))
        self.b2p = jnp.zeros((1, cls_p), jnp.float32).at[:, :classes].set(
            b2.reshape(1, classes).astype(jnp.float32))

    def __call__(self, x, block_batch=None):
        return _forward_padded(x, self.w1p, self.b1p, self.w2p, self.b2p,
                               hidden=self.hidden, classes=self.classes,
                               block_batch=block_batch)


def reference_forward(x, w1, b1, w2, b2, compute_dtype=jnp.bfloat16):
    """Precision-matched reference (bf16 operands, f32 accumulation)."""
    xb = x.astype(compute_dtype)
    h = jnp.dot(xb, w1.astype(compute_dtype), preferred_element_type=jnp.float32)
    h = jnp.maximum(h + b1.reshape(1, -1).astype(jnp.float32), 0.0)
    y = jnp.dot(h.astype(compute_dtype), w2.astype(compute_dtype),
                preferred_element_type=jnp.float32)
    return (y + b2.reshape(1, -1).astype(jnp.float32)).astype(x.dtype)


if __name__ == "__main__":
    key = jax.random.PRNGKey(0)
    kx, kw1, kb1, kw2, kb2, kx2, kx3 = jax.random.split(key, 7)

    # Net(dim=32, classes=16, hidden=64), small batch.
    batch, dim, hidden, classes = 8, 32, 64, 16
    bound1 = 1.0 / float(dim) ** 0.5
    bound2 = 1.0 / float(hidden) ** 0.5

    x = jax.random.normal(kx, (batch, dim), jnp.float32)
    # nn.Linear-style uniform(-1/sqrt(fan_in), 1/sqrt(fan_in)) init; weights
    # stored transposed (in, out) relative to PyTorch's (out, in).
    w1 = jax.random.uniform(kw1, (dim, hidden), jnp.float32, -bound1, bound1)
    b1 = jax.random.uniform(kb1, (hidden,), jnp.float32, -bound1, bound1)
    w2 = jax.random.uniform(kw2, (hidden, classes), jnp.float32, -bound2, bound2)
    b2 = jax.random.uniform(kb2, (classes,), jnp.float32, -bound2, bound2)

    net = PallasNet(w1, b1, w2, b2)   # one-time parameter pad/cast

    out = jax.block_until_ready(net(x))
    assert out.shape == (batch, classes)
    assert out.dtype == x.dtype

    ref_matched = reference_forward(x, w1, b1, w2, b2)
    ref_f32 = jnp.maximum(x @ w1 + b1[None, :], 0.0) @ w2 + b2[None, :]
    assert jnp.allclose(out, ref_matched, atol=2e-3, rtol=2e-3)
    assert jnp.allclose(out, ref_f32, atol=5e-2, rtol=5e-2)

    # Larger batch exercises the tiled path: grid=(4,), pipelined + megacore.
    big_batch = 1024
    xb = jax.random.normal(kx2, (big_batch, dim), jnp.float32)
    out_b = jax.block_until_ready(net(xb))
    assert out_b.shape == (big_batch, classes)
    assert jnp.allclose(out_b, reference_forward(xb, w1, b1, w2, b2),
                        atol=2e-3, rtol=2e-3)

    # Non-multiple-of-8 batch exercises the (cheap) row-only pad path.
    x_odd = jax.random.normal(kx3, (5, dim), jnp.float32)
    out_odd = jax.block_until_ready(net(x_odd))
    assert out_odd.shape == (5, classes)
    assert jnp.allclose(out_odd, reference_forward(x_odd, w1, b1, w2, b2),
                        atol=2e-3, rtol=2e-3)

    print("KERNEL_OK")
</pallas_src>

<mosaic_0001>
module attributes {stable_mosaic.version = 11 : i64} {
  func.func @mlp_kernel(%arg0: i32, %arg1: memref<8x32xf32, #tpu.memory_space<vmem>>, %arg2: memref<32x128xbf16, #tpu.memory_space<vmem>>, %arg3: memref<1x128xf32, #tpu.memory_space<vmem>>, %arg4: memref<128x128xbf16, #tpu.memory_space<vmem>>, %arg5: memref<1x128xf32, #tpu.memory_space<vmem>>, %arg6: memref<8x128xf32, #tpu.memory_space<vmem>>) attributes {dimension_semantics = [#tpu.dimension_semantics<parallel>], iteration_bounds = array<i64: 1>, scalar_prefetch = 0 : i64, scratch_operands = 0 : i64, tpu.core_type = #tpu.core_type<tc>, window_params = [{transform_indices = @transform_0, window_bounds = array<i64: 8, 32>}, {pipeline_mode = #tpu.pipeline_mode<synchronous>, transform_indices = @transform_1, window_bounds = array<i64: 32, 128>}, {pipeline_mode = #tpu.pipeline_mode<synchronous>, transform_indices = @transform_2, window_bounds = array<i64: 1, 128>}, {pipeline_mode = #tpu.pipeline_mode<synchronous>, transform_indices = @transform_3, window_bounds = array<i64: 128, 128>}, {pipeline_mode = #tpu.pipeline_mode<synchronous>, transform_indices = @transform_4, window_bounds = array<i64: 1, 128>}, {transform_indices = @transform_5, window_bounds = array<i64: 8, 128>}]} {
    %c0 = arith.constant 0 : index
    %c0_0 = arith.constant 0 : index
    %0 = vector.load %arg1[%c0, %c0_0] : memref<8x32xf32, #tpu.memory_space<vmem>>, vector<8x32xf32>
    %1 = arith.truncf %0 : vector<8x32xf32> to vector<8x32xbf16>
    %c0_1 = arith.constant 0 : index
    %c0_2 = arith.constant 0 : index
    %2 = vector.load %arg2[%c0_1, %c0_2] : memref<32x128xbf16, #tpu.memory_space<vmem>>, vector<32x128xbf16>
    %cst = arith.constant dense<0.000000e+00> : vector<8x128xf32>
    %3 = tpu.matmul %1, %2, %cst {dimension_numbers = #tpu.dot_dimension_numbers<[1], [0], [0], [1], [0, 0, 1, 1], [], []>} : vector<8x32xbf16>, vector<32x128xbf16>, vector<8x128xf32> -> vector<8x128xf32>
    %c0_3 = arith.constant 0 : index
    %c0_4 = arith.constant 0 : index
    %4 = vector.load %arg3[%c0_3, %c0_4] : memref<1x128xf32, #tpu.memory_space<vmem>>, vector<1x128xf32>
    %5 = vector.broadcast %4 : vector<1x128xf32> to vector<8x128xf32>
    %6 = arith.addf %3, %5 : vector<8x128xf32>
    %cst_5 = arith.constant 0.000000e+00 : f32
    %7 = vector.broadcast %cst_5 : f32 to vector<8x128xf32>
    %8 = arith.maximumf %6, %7 : vector<8x128xf32>
    %9 = arith.truncf %8 : vector<8x128xf32> to vector<8x128xbf16>
    %c0_6 = arith.constant 0 : index
    %c0_7 = arith.constant 0 : index
    %10 = vector.load %arg4[%c0_6, %c0_7] : memref<128x128xbf16, #tpu.memory_space<vmem>>, vector<128x128xbf16>
    %cst_8 = arith.constant dense<0.000000e+00> : vector<8x128xf32>
    %11 = tpu.matmul %9, %10, %cst_8 {dimension_numbers = #tpu.dot_dimension_numbers<[1], [0], [0], [1], [0, 0, 1, 1], [], []>} : vector<8x128xbf16>, vector<128x128xbf16>, vector<8x128xf32> -> vector<8x128xf32>
    %c0_9 = arith.constant 0 : index
    %c0_10 = arith.constant 0 : index
    %12 = vector.load %arg5[%c0_9, %c0_10] : memref<1x128xf32, #tpu.memory_space<vmem>>, vector<1x128xf32>
    %13 = vector.broadcast %12 : vector<1x128xf32> to vector<8x128xf32>
    %14 = arith.addf %11, %13 : vector<8x128xf32>
    %c0_11 = arith.constant 0 : index
    %c0_12 = arith.constant 0 : index
    %15 = vector.load %arg6[%c0_11, %c0_12] : memref<8x128xf32, #tpu.memory_space<vmem>>, vector<8x128xf32>
    tpu.vector_store %arg6[%c0_11, %c0_12], %14 {strides = array<i32>} : memref<8x128xf32, #tpu.memory_space<vmem>>, vector<8x128xf32>,
    return
  }
  func.func @transform_0(%arg0: i32) -> (i32, i32) {
    %c0_i32 = arith.constant 0 : i32
    %c0_i32_0 = arith.constant 0 : i32
    return %arg0, %c0_i32 : i32, i32
  }
  func.func @transform_1(%arg0: i32) -> (i32, i32) {
    %c0_i32 = arith.constant 0 : i32
    %c0_i32_0 = arith.constant 0 : i32
    %c0_i32_1 = arith.constant 0 : i32
    return %c0_i32, %c0_i32_0 : i32, i32
  }
  func.func @transform_2(%arg0: i32) -> (i32, i32) {
    %c0_i32 = arith.constant 0 : i32
    %c0_i32_0 = arith.constant 0 : i32
    %c0_i32_1 = arith.constant 0 : i32
    return %c0_i32, %c0_i32_0 : i32, i32
  }
  func.func @transform_3(%arg0: i32) -> (i32, i32) {
    %c0_i32 = arith.constant 0 : i32
    %c0_i32_0 = arith.constant 0 : i32
    %c0_i32_1 = arith.constant 0 : i32
    return %c0_i32, %c0_i32_0 : i32, i32
  }
  func.func @transform_4(%arg0: i32) -> (i32, i32) {
    %c0_i32 = arith.constant 0 : i32
    %c0_i32_0 = arith.constant 0 : i32
    %c0_i32_1 = arith.constant 0 : i32
    return %c0_i32, %c0_i32_0 : i32, i32
  }
  func.func @transform_5(%arg0: i32) -> (i32, i32) {
    %c0_i32 = arith.constant 0 : i32
    %c0_i32_0 = arith.constant 0 : i32
    return %arg0, %c0_i32 : i32, i32
  }
}

</mosaic_0001>

<llo_original>
// kernel: _forward_padded.1
$region0: #{_forward_padded.1}
  #allocation0 [shape = 'u32[]', space=smem, size = 0x4, offset = 0x4, fixed_abs, tag = 'smem constant byte address 0x4 - core index']
  #allocation1 [shape = 'u32[144,128]{1,0:T(1,128)}', space=vmem, size = 0x12000, scoped, tag = 'internal scratch']
  %s0 = inlined_call_operand.hbm [shape: f32[8,32], index: 0, kind: input, shape index: {}]
  %s1 = inlined_call_operand.hbm [shape: bf16[32,128], index: 1, kind: input, shape index: {}]
  %s2 = inlined_call_operand.vmem [shape: f32[1,128], index: 2, kind: input, shape index: {}]
  %s3 = inlined_call_operand.hbm [shape: bf16[128,128], index: 3, kind: input, shape index: {}]
  %s4 = inlined_call_operand.vmem [shape: f32[1,128], index: 4, kind: input, shape index: {}]
  %s5 = inlined_call_operand.hbm [shape: f32[8,128], index: 5, kind: output, shape index: {}]
  %s6 = sld [smem:[#allocation0]]
  $region42: #{_forward_padded.1} parent=0
    _
  %s8 = ssub.s32 1, %s6
  %s9 = scalar_select 0, %s8, %s6
  $region1: #{_forward_padded.1} parent=0
    #allocation2 [shape = 'u8[4096]{0}', space=vmem, size = 0x1000, scoped, tag = 'input window, operand 0, single buffered']
    #allocation3 [shape = 's32[1]{0}', space=sflag, size = 0x4, scoped, tag = 'scoped memory for _forward_padded.1']
    #allocation4 [shape = 's32[1]{0}', space=sflag, size = 0x4, scoped, tag = 'scoped memory for _forward_padded.1']
    #allocation5 [shape = 'u8[8192]{0}', space=vmem, size = 0x2000, scoped, tag = 'input window, operand 1, single buffered']
    #allocation6 [shape = 's32[1]{0}', space=sflag, size = 0x4, scoped, tag = 'scoped memory for _forward_padded.1']
    #allocation7 [shape = 'u8[32768]{0}', space=vmem, size = 0x8000, scoped, tag = 'input window, operand 3, single buffered']
    #allocation8 [shape = 'u8[4096]{0}', space=vmem, size = 0x1000, scoped, tag = 'output window, operand 0, single buffered']
    %10 = vsyncpa [#allocation3], 0
    %11 = vsyncpa [#allocation6], 0
    %12 = vsyncpa [#allocation4], 0
    // Predicated region
    $region2: #{_forward_padded.1} parent=1 // pred_check
      _
    $region3: #{_forward_padded.1} parent=1 // pred_check_branch
      %14 = sbr.rel (0) target = $region5
    $region4: #{_forward_padded.1} parent=1 // pred_region
      %s16 = ssub.s32 128, 128
      %17 = vsyncadd [#allocation3], %s16
      %s19 = sshll.u32 [#allocation2], 4
      %s20 = int_to_ptr.vmem [resolvable:$true] %s19
      %22 = dma.hbm_to_vmem [thread:$0]  %s0, 128, %s20, [#allocation3]
    $region5: #{_forward_padded.1} parent=1 // pred_fallthru
      _
    // Predicated region
    $region6: #{_forward_padded.1} parent=1 // pred_check
      _
    $region7: #{_forward_padded.1} parent=1 // pred_check_branch
      %24 = sbr.rel (0) target = $region9
    $region8: #{_forward_padded.1} parent=1 // pred_region
      %s26 = ssub.s32 256, 256
      %27 = vsyncadd [#allocation6], %s26
      %s28 = sshll.u32 [#allocation5], 4
      %s29 = int_to_ptr.vmem [resolvable:$true] %s28
      %34 = dma.hbm_to_vmem [thread:$0]  %s1, 256, %s29, [#allocation6], 64, 64, 4
    $region9: #{_forward_padded.1} parent=1 // pred_fallthru
      _
    // Predicated region
    $region10: #{_forward_padded.1} parent=1 // pred_check
      _
    $region11: #{_forward_padded.1} parent=1 // pred_check_branch
      %36 = sbr.rel (0) target = $region13
    $region12: #{_forward_padded.1} parent=1 // pred_region
      _
    $region13: #{_forward_padded.1} parent=1 // pred_fallthru
      _
    // Predicated region
    $region14: #{_forward_padded.1} parent=1 // pred_check
      _
    $region15: #{_forward_padded.1} parent=1 // pred_check_branch
      %38 = sbr.rel (0) target = $region17
    $region16: #{_forward_padded.1} parent=1 // pred_region
      %s40 = ssub.s32 1024, 1024
      %41 = vsyncadd [#allocation6], %s40
      %s42 = sshll.u32 [#allocation7], 4
      %s43 = int_to_ptr.vmem [resolvable:$true] %s42
      %48 = dma.hbm_to_vmem [thread:$0]  %s3, 1024, %s43, [#allocation6], 64, 64, 4
    $region17: #{_forward_padded.1} parent=1 // pred_fallthru
      _
    // Predicated region
    $region18: #{_forward_padded.1} parent=1 // pred_check
      _
    $region19: #{_forward_padded.1} parent=1 // pred_check_branch
      %50 = sbr.rel (0) target = $region21
    $region20: #{_forward_padded.1} parent=1 // pred_region
      _
    $region21: #{_forward_padded.1} parent=1 // pred_fallthru
      _
    // Predicated region
    $region22: #{_forward_padded.1} parent=1 // pred_check
      _
    $region23: #{_forward_padded.1} parent=1 // pred_check_branch
      %52 = sbr.rel (0) target = $region25
    $region24: #{_forward_padded.1} parent=1 // pred_region
      %53 = dma.done [#allocation3], 128
    $region25: #{_forward_padded.1} parent=1 // pred_fallthru
      _
    // Predicated region
    $region26: #{_forward_padded.1} parent=1 // pred_check
      _
    $region27: #{_forward_padded.1} parent=1 // pred_check_branch
      %55 = sbr.rel (0) target = $region29
    $region28: #{_forward_padded.1} parent=1 // pred_region
      %56 = dma.done [#allocation6], 256
    $region29: #{_forward_padded.1} parent=1 // pred_fallthru
      _
    // Predicated region
    $region30: #{_forward_padded.1} parent=1 // pred_check
      _
    $region31: #{_forward_padded.1} parent=1 // pred_check_branch
      %58 = sbr.rel (0) target = $region33
    $region32: #{_forward_padded.1} parent=1 // pred_region
      %59 = dma.done [#allocation6], 1024
    $region33: #{_forward_padded.1} parent=1 // pred_fallthru
      _
    %v61 = vld [vmem:[#allocation2] sm:$0xff]
    %v62 = vpack.c.bf16 %v61, %v61
    %v63 = vld [vmem:[#allocation5] sm:$0xf]
    %v64 = vld [vmem:[#allocation5 + $0x4] sm:$0xf]
    %v65 = vld [vmem:[#allocation5 + $0x8] sm:$0xf]
    %v66 = vld [vmem:[#allocation5 + $0xc] sm:$0xf]
    %v67 = vld [vmem:[%s2] sm:$0x1]
    %v69 = vlaneseq
    %v70 = vshrl.u32 %v69, 7
    %v71 = vsub.s32 0, %v70
    %v72 = vrot.slane %v67, %v71
    %v78 = vunpack.c.l.b16 %v63
    %v79 = vunpack.c.l.b16 %v64
    %v80 = vunpack.c.l.b16 %v65
    %v81 = vunpack.c.l.b16 %v66
    %v82 = vpack.c.b16 %v79, %v78
    %v83 = vpack.c.b16 %v81, %v80
    %vm86 = vcmask 261120
    %v88 = vsel %vm86, %v62, 0
    %90 = vmatprep.subr.bf16.mxu0 0
    %91 = vmatpush1.bf16.msra.mxu0 %v82
    %92 = vmatprep.subr.bf16.mxu0 0
    %93 = vmatpush1.bf16.msra.mxu0 %v83
    %94 = vmatprep.subr.bf16.mxu0 0
    %95 = vmatpush1.bf16.msra.mxu0 0
    %96 = vmatprep.subr.bf16.mxu0 0
    %97 = vmatpush1.bf16.msra.mxu0 0
    %98 = vmatprep.subr.bf16.mxu0 0
    %99 = vmatpush1.bf16.msra.mxu0 0
    %100 = vmatprep.subr.bf16.mxu0 0
    %101 = vmatpush1.bf16.msra.mxu0 0
    %102 = vmatprep.subr.bf16.mxu0 0
    %103 = vmatpush1.bf16.msra.mxu0 0
    %104 = vmatprep.subr.bf16.mxu0 0
    %105 = vmatpush1.bf16.msra.mxu0 0
    %106 = vmatprep.subr.bf16.mxu0 0
    %107 = vmatpush1.bf16.msra.mxu0 0
    %108 = vmatprep.subr.bf16.mxu0 0
    %109 = vmatpush1.bf16.msra.mxu0 0
    %110 = vmatprep.subr.bf16.mxu0 0
    %111 = vmatpush1.bf16.msra.mxu0 0
    %112 = vmatprep.subr.bf16.mxu0 0
    %113 = vmatpush1.bf16.msra.mxu0 0
    %114 = vmatprep.subr.bf16.mxu0 0
    %115 = vmatpush1.bf16.msra.mxu0 0
    %116 = vmatprep.subr.bf16.mxu0 0
    %117 = vmatpush1.bf16.msra.mxu0 0
    %118 = vmatprep.subr.bf16.mxu0 0
    %119 = vmatpush1.bf16.msra.mxu0 0
    %120 = vmatprep.subr.bf16.mxu0 0
    %121 = vmatpush1.bf16.msra.mxu0 0
    %122 = vmatprep.mubr.bf16.mxu0 0
    %123 = vmatmul.mubr.bf16.gmra.mrb[0].mxu0 %v88
    %v124 = vpop.f32.mrb[0].mxu0
    %v125 = vadd.f32 %v72, %v124
    %v126 = vpop.f32.mrb[0].mxu0
    %v127 = vpop.f32.mrb[0].mxu0
    %v128 = vpop.f32.mrb[0].mxu0
    %129 = vdwg.mxu0
    %v130 = vmax.f32 %v125, 0.0
    %v131 = vpack.c.bf16 %v130, %v130
    %v132 = vld [vmem:[#allocation7] sm:$0xf]
    %v133 = vld [vmem:[#allocation7 + $0x4] sm:$0xf]
    %v134 = vld [vmem:[#allocation7 + $0x8] sm:$0xf]
    %v135 = vld [vmem:[#allocation7 + $0xc] sm:$0xf]
    %v136 = vld [vmem:[#allocation7 + $0x10] sm:$0xf]
    %v137 = vld [vmem:[#allocation7 + $0x14] sm:$0xf]
    %v138 = vld [vmem:[#allocation7 + $0x18] sm:$0xf]
    %v139 = vld [vmem:[#allocation7 + $0x1c] sm:$0xf]
    %v140 = vld [vmem:[#allocation7 + $0x20] sm:$0xf]
    %v141 = vld [vmem:[#allocation7 + $0x24] sm:$0xf]
    %v142 = vld [vmem:[#allocation7 + $0x28] sm:$0xf]
    %v143 = vld [vmem:[#allocation7 + $0x2c] sm:$0xf]
    %v144 = vld [vmem:[#allocation7 + $0x30] sm:$0xf]
    %v145 = vld [vmem:[#allocation7 + $0x34] sm:$0xf]
    %v146 = vld [vmem:[#allocation7 + $0x38] sm:$0xf]
    %v147 = vld [vmem:[#allocation7 + $0x3c] sm:$0xf]
    %v148 = vld [vmem:[%s4] sm:$0x1]
    %v150 = vlaneseq
    %v151 = vshrl.u32 %v150, 7
    %v152 = vsub.s32 0, %v151
    %v153 = vrot.slane %v148, %v152
    %v171 = vunpack.c.l.b16 %v132
    %v172 = vunpack.c.l.b16 %v133
    %v173 = vunpack.c.l.b16 %v134
    %v174 = vunpack.c.l.b16 %v135
    %v175 = vunpack.c.l.b16 %v136
    %v176 = vunpack.c.l.b16 %v137
    %v177 = vunpack.c.l.b16 %v138
    %v178 = vunpack.c.l.b16 %v139
    %v179 = vunpack.c.l.b16 %v140
    %v180 = vunpack.c.l.b16 %v141
    %v181 = vunpack.c.l.b16 %v142
    %v182 = vunpack.c.l.b16 %v143
    %v183 = vunpack.c.l.b16 %v144
    %v184 = vunpack.c.l.b16 %v145
    %v185 = vunpack.c.l.b16 %v146
    %v186 = vunpack.c.l.b16 %v147
    %v187 = vpack.c.b16 %v172, %v171
    %v188 = vpack.c.b16 %v174, %v173
    %v189 = vpack.c.b16 %v176, %v175
    %v190 = vpack.c.b16 %v178, %v177
    %v191 = vpack.c.b16 %v180, %v179
    %v192 = vpack.c.b16 %v182, %v181
    %v193 = vpack.c.b16 %v184, %v183
    %v194 = vpack.c.b16 %v186, %v185
    %203 = vmatprep.subr.bf16.mxu0 0
    %204 = vmatpush1.bf16.msra.mxu0 %v187
    %205 = vmatprep.subr.bf16.mxu0 0
    %206 = vmatpush1.bf16.msra.mxu0 %v188
    %207 = vmatprep.subr.bf16.mxu0 0
    %208 = vmatpush1.bf16.msra.mxu0 %v189
    %209 = vmatprep.subr.bf16.mxu0 0
    %210 = vmatpush1.bf16.msra.mxu0 %v190
    %211 = vmatprep.subr.bf16.mxu0 0
    %212 = vmatpush1.bf16.msra.mxu0 %v191
    %213 = vmatprep.subr.bf16.mxu0 0
    %214 = vmatpush1.bf16.msra.mxu0 %v192
    %215 = vmatprep.subr.bf16.mxu0 0
    %216 = vmatpush1.bf16.msra.mxu0 %v193
    %217 = vmatprep.subr.bf16.mxu0 0
    %218 = vmatpush1.bf16.msra.mxu0 %v194
    %219 = vmatprep.subr.bf16.mxu0 0
    %220 = vmatpush1.bf16.msra.mxu0 0
    %221 = vmatprep.subr.bf16.mxu0 0
    %222 = vmatpush1.bf16.msra.mxu0 0
    %223 = vmatprep.subr.bf16.mxu0 0
    %224 = vmatpush1.bf16.msra.mxu0 0
    %225 = vmatprep.subr.bf16.mxu0 0
    %226 = vmatpush1.bf16.msra.mxu0 0
    %227 = vmatprep.subr.bf16.mxu0 0
    %228 = vmatpush1.bf16.msra.mxu0 0
    %229 = vmatprep.subr.bf16.mxu0 0
    %230 = vmatpush1.bf16.msra.mxu0 0
    %231 = vmatprep.subr.bf16.mxu0 0
    %232 = vmatpush1.bf16.msra.mxu0 0
    %233 = vmatprep.subr.bf16.mxu0 0
    %234 = vmatpush1.bf16.msra.mxu0 0
    %235 = vmatprep.mubr.bf16.mxu0 0
    %236 = vmatmul.mubr.bf16.gmra.mrb[0].mxu0 %v131
    %v237 = vpop.f32.mrb[0].mxu0
    %v238 = vadd.f32 %v153, %v237
    %v239 = vpop.f32.mrb[0].mxu0
    %v240 = vpop.f32.mrb[0].mxu0
    %v241 = vpop.f32.mrb[0].mxu0
    %242 = vdwg.mxu0
    %243 = vst [vmem:[#allocation8] sm:$0xff] %v238
    // Predicated region
    $region34: #{_forward_padded.1} parent=1 // pred_check
      _
    $region35: #{_forward_padded.1} parent=1 // pred_check_branch
      %245 = sbr.rel (0) target = $region37
    $region36: #{_forward_padded.1} parent=1 // pred_region
      %s247 = ssub.s32 128, 128
      %248 = vsyncadd [#allocation4], %s247
      %s250 = sshll.u32 [#allocation8], 4
      %s251 = int_to_ptr.vmem [resolvable:$true] %s250
      %253 = dma.vmem_to_hbm [thread:$0]  %s251, 128, %s5, [#allocation4]
    $region37: #{_forward_padded.1} parent=1 // pred_fallthru
      _
    // Predicated region
    $region38: #{_forward_padded.1} parent=1 // pred_check
      _
    $region39: #{_forward_padded.1} parent=1 // pred_check_branch
      %255 = sbr.rel (0) target = $region41
    $region40: #{_forward_padded.1} parent=1 // pred_region
      %256 = dma.done [#allocation4], 128
    $region41: #{_forward_padded.1} parent=1 // pred_fallthru
      _
    %257 = vsyncpa [#allocation3], 1
    %258 = vsyncpa [#allocation6], 1
    %259 = vsyncpa [#allocation4], 1

</llo_original>
